<compile_context>
chip_gen: v5e
topology: v5e:2x2
jax: 0.10.0
libtpu: 0.0.40
codegen_flags: <defaults>
</compile_context>

<pallas_src>
import jax
import jax.numpy as jnp
import numpy as np
from jax.experimental import pallas as pl
from jax.experimental.pallas import tpu as pltpu

NEG_SLOPE = 0.01  # nn.LeakyReLU default


def _leaky(x):
    return jnp.where(x > 0, x, NEG_SLOPE * x)


# ----------------------------- Pallas kernel -----------------------------

def gnnbase_kernel(xf_ref, tadd_ref, w_ref, ba_ref, bg_ref, wv_ref, bv_ref,
                   val_ref, ha_ref):
    """Fused GNNBase forward for one batch chunk.

    xf_ref   : [bb, N*F]      per-node [cond, x] features, flattened (F = D + C)
    tadd_ref : [bb, H]        (sum_n A_row[n]) * W_gcn[:T][type_b]  (type one-hot part)
    w_ref    : [N*F, N*H + H] [ block-diag actor weight | adjacency-premultiplied GCN weight ]
    ba_ref   : [1, N*H]       actor bias tiled over nodes
    bg_ref   : [1, H]         GCN bias
    wv_ref   : [1, H]         critic_linear weight (as a row)
    bv_ref   : [1, 1]         critic_linear bias (SMEM scalar)
    val_ref  : [bb, 1]        value output (f32)
    ha_ref   : [bb, N*H]      hidden_actor output (lane-dense slab)
    """
    NH = ha_ref.shape[-1]

    # Single MXU pass: actor readout for all nodes + critic aggregation.
    y = jnp.dot(xf_ref[...], w_ref[...], preferred_element_type=jnp.float32)

    # --- actor readout (lane-dense store) ---
    ya = y[:, :NH]
    ha_ref[...] = _leaky(ya + ba_ref[...]).astype(ha_ref.dtype)

    # --- critic / value path ---
    yc = y[:, NH:]                                           # [bb, H]
    hc = _leaky(yc + tadd_ref[...] + bg_ref[...])            # [bb, H]
    # H -> 1 head as a VPU multiply + lane reduce (no padded MXU pass).
    val = jnp.sum(hc * wv_ref[...], axis=1, keepdims=True) + bv_ref[0, 0]
    val_ref[...] = val.astype(val_ref.dtype)


# ----------------------------- wrapper -----------------------------------

def build_gcn_norm_row(edge_index, num_nodes, node_index):
    """Only the needed row of PyG GCNConv's normalized adjacency
       (add_self_loops=True, symmetric norm): A_norm[node_index, :]."""
    row = edge_index[0]  # source
    col = edge_index[1]  # target
    loop = jnp.arange(num_nodes, dtype=edge_index.dtype)
    row = jnp.concatenate([row, loop])
    col = jnp.concatenate([col, loop])
    w = jnp.ones(row.shape[0], jnp.float32)
    deg = jnp.zeros((num_nodes,), jnp.float32).at[col].add(w)
    dinv = jnp.where(deg > 0, jax.lax.rsqrt(deg), 0.0)
    norm = dinv[row] * dinv[col] * w
    sel = jnp.where(col == node_index, norm, 0.0)
    a_row = jnp.zeros((num_nodes,), jnp.float32).at[row].add(sel)
    return a_row  # [N]


def build_gcn_norm_adj(edge_index, num_nodes):
    """Full dense normalized adjacency (used by the pure-JAX reference only)."""
    row = edge_index[0]
    col = edge_index[1]
    loop = jnp.arange(num_nodes, dtype=edge_index.dtype)
    row = jnp.concatenate([row, loop])
    col = jnp.concatenate([col, loop])
    w = jnp.ones(row.shape[0], jnp.float32)
    deg = jnp.zeros((num_nodes,), jnp.float32).at[col].add(w)
    dinv = jnp.where(deg > 0, jax.lax.rsqrt(deg), 0.0)
    norm = dinv[row] * dinv[col] * w
    a = jnp.zeros((num_nodes, num_nodes), jnp.float32).at[col, row].add(norm)
    return a


def _pick_batch_block(B):
    """Default chunking: ~8 grid steps with bb a multiple of 8 (pipelines input
       prefetch against hidden_actor writeback; shards across TCs on v7x).
       Small / non-multiple-of-8 batches run as a single grid step."""
    if B % 8 != 0 or B < 64:
        return B
    bb = max(8, (B // 8) // 8 * 8)
    while B % bb != 0:
        bb -= 8
    return max(bb, 8)


def gnnbase_forward(x, edge_index, condition_state, node_index, type_index,
                    params, batch_block=None, io_dtype=jnp.float32):
    """Returns (value [B,1] f32, hidden_actor [B,N,H] io_dtype)."""
    B, N, D = x.shape
    C = condition_state.shape[-1]
    H = params["w_gcn"].shape[-1]
    T = params["w_gcn"].shape[0] - D        # type one-hot width
    Fd = D + C                              # per-node feature width after folding cond
    NF = N * Fd
    NH = N * H

    bb = _pick_batch_block(B) if batch_block is None else batch_block
    assert B % bb == 0 and (bb == B or bb % 8 == 0), "bad batch_block"

    # ---- plain-JAX glue: cheap, data-dependent preprocessing ----
    a_row = build_gcn_norm_row(edge_index, N, node_index)          # [N]
    a_sum = jnp.sum(a_row)

    w_gcn_t = params["w_gcn"][:T]                                  # [T, H]
    w_gcn_x = params["w_gcn"][T:]                                  # [D, H]
    tadd = a_sum * jnp.take(w_gcn_t, type_index, axis=0)           # [B, H]

    # Lane-dense input: per node [cond, x], flattened to [B, N*F].
    xf = jnp.concatenate([condition_state, x], axis=-1).reshape(B, NF)

    # Block-diagonal actor weight: rows n*F..(n+1)*F-1 -> cols n*H..(n+1)*H-1.
    w_act = params["w_act"]                                        # [F, H] (cond rows first)
    eye_n = jnp.eye(N, dtype=w_act.dtype)
    w_act_bd = (eye_n[:, None, :, None] * w_act[None, :, None, :]).reshape(NF, NH)

    # Adjacency-premultiplied GCN weight (x rows only; cond rows are zero).
    w_gcn_full = jnp.concatenate([jnp.zeros((C, H), w_gcn_x.dtype), w_gcn_x], axis=0)
    w_gcn_agg = (a_row[:, None, None] * w_gcn_full[None, :, :]).reshape(NF, H)

    # Single fused weight -> one MXU pass per chunk.
    w_all = jnp.concatenate([w_act_bd, w_gcn_agg], axis=1)         # [N*F, N*H + H]

    b_act_tiled = jnp.tile(params["b_act"].reshape(1, H), (1, N))  # [1, N*H]
    b_gcn = params["b_gcn"].reshape(1, H)
    w_val_row = params["w_val"].reshape(1, H)
    b_val = params["b_val"].reshape(1, 1)

    xf = xf.astype(io_dtype)
    w_all = w_all.astype(io_dtype)

    # ---- VMEM budget (double-buffered blocks), capped under v7x physical VMEM ----
    def _nbytes(shape, dt):
        return int(np.prod(shape)) * jnp.dtype(dt).itemsize
    per_step = 2 * (_nbytes((bb, NF), io_dtype) + _nbytes((bb, H), jnp.float32)
                    + _nbytes((bb, NH), io_dtype) + _nbytes((bb, 1), jnp.float32))
    resident = 2 * (_nbytes((NF, NH + H), io_dtype) + _nbytes((1, NH), jnp.float32)
                    + 2 * _nbytes((1, H), jnp.float32))
    vmem_limit = int(min(max(2 * (per_step + resident), 16 << 20), 48 << 20))

    grid = (B // bb,)
    in_specs = [
        pl.BlockSpec((bb, NF), lambda i: (i, 0)),           # xf
        pl.BlockSpec((bb, H), lambda i: (i, 0)),            # type additive term
        pl.BlockSpec((NF, NH + H), lambda i: (0, 0)),       # fused weight (shared)
        pl.BlockSpec((1, NH), lambda i: (0, 0)),            # b_act tiled
        pl.BlockSpec((1, H), lambda i: (0, 0)),             # b_gcn
        pl.BlockSpec((1, H), lambda i: (0, 0)),             # w_val (as a row)
        pl.BlockSpec(memory_space=pltpu.MemorySpace.SMEM),  # b_val scalar
    ]
    out_specs = (
        pl.BlockSpec((bb, 1), lambda i: (i, 0)),            # value
        pl.BlockSpec((bb, NH), lambda i: (i, 0)),           # hidden_actor (lane-dense)
    )
    out_shape = (
        jax.ShapeDtypeStruct((B, 1), jnp.float32),
        jax.ShapeDtypeStruct((B, NH), io_dtype),
    )

    val, ha = pl.pallas_call(
        gnnbase_kernel,
        grid=grid,
        in_specs=in_specs,
        out_specs=out_specs,
        out_shape=out_shape,
        compiler_params=pltpu.CompilerParams(
            dimension_semantics=("parallel",),
            vmem_limit_bytes=vmem_limit),
    )(xf, tadd, w_all, b_act_tiled, b_gcn, w_val_row, b_val)

    return val, ha.reshape(B, N, H)


class PolicyPallas:
    """Pallas version of Policy (base = GNNBase with hidden_size=16)."""

    def __init__(self, node_state_dim, node_num, type_num,
                 condition_state_size=1, hidden_size=16, key=None):
        self.node_state_dim = node_state_dim
        self.node_num = node_num
        self.type_num = type_num
        self.cond_size = condition_state_size
        self.hidden_size = hidden_size
        key = jax.random.PRNGKey(0) if key is None else key
        ks = jax.random.split(key, 6)
        fc = node_state_dim + type_num               # GCN input features (type first)
        fa = node_state_dim + condition_state_size   # actor input features (cond first)
        h = hidden_size
        s = 0.1
        self.params = {
            "w_gcn": s * jax.random.normal(ks[0], (fc, h), jnp.float32),
            "b_gcn": s * jax.random.normal(ks[1], (1, h), jnp.float32),
            "w_act": s * jax.random.normal(ks[2], (fa, h), jnp.float32),
            "b_act": s * jax.random.normal(ks[3], (1, h), jnp.float32),
            "w_val": s * jax.random.normal(ks[4], (h, 1), jnp.float32),
            "b_val": s * jax.random.normal(ks[5], (1, 1), jnp.float32),
        }

    def base_forward(self, x, edge_index, condition_state, node_index, type_index,
                     batch_block=None, io_dtype=jnp.float32):
        """x: [B, N, D]; edge_index: [2, E]; condition_state: [B, N, C];
           node_index: int; type_index: [B] int."""
        return gnnbase_forward(x, edge_index, condition_state, node_index,
                               type_index, self.params,
                               batch_block=batch_block, io_dtype=io_dtype)

    def get_value(self, x, edge_index, condition_state, node_index, type_index):
        value, _ = self.base_forward(x, edge_index, condition_state,
                                     node_index, type_index)
        return value


# ------------------------- pure-JAX reference -----------------------------

def _reference_forward(policy, x, edge_index, condition_state, node_index, type_index):
    """Direct (concat + full dense GCN) reference of GNNBase.forward."""
    B, N, _ = x.shape
    p = policy.params
    type_onehot = jax.nn.one_hot(type_index, policy.type_num, dtype=jnp.float32)
    xc = jnp.concatenate(
        [jnp.broadcast_to(type_onehot[:, None, :], (B, N, policy.type_num)), x], -1)
    xa = jnp.concatenate([condition_state, x], -1)
    a = build_gcn_norm_adj(edge_index, N)
    hc = jnp.einsum("ij,bjh->bih", a, xc @ p["w_gcn"]) + p["b_gcn"]
    hc = jnp.where(hc > 0, hc, NEG_SLOPE * hc)
    ha = xa @ p["w_act"] + p["b_act"]
    ha = jnp.where(ha > 0, ha, NEG_SLOPE * ha)
    val = hc[:, node_index] @ p["w_val"] + p["b_val"]
    return val, ha


if __name__ == "__main__":
    # Small deterministic example shapes
    B, N, D, T, C, H = 2, 8, 6, 4, 1, 16
    key = jax.random.PRNGKey(0)
    k1, k2, k3 = jax.random.split(key, 3)

    x = jax.random.normal(k1, (B, N, D), jnp.float32)                     # node states
    condition_state = jax.random.normal(k2, (B, N, C), jnp.float32)       # per-node condition
    type_index = jnp.array([1, 3], dtype=jnp.int32)                       # [B]
    node_index = 3
    # Simple ring graph (undirected, both directions listed)
    src = jnp.concatenate([jnp.arange(N), (jnp.arange(N) + 1) % N])
    dst = jnp.concatenate([(jnp.arange(N) + 1) % N, jnp.arange(N)])
    edge_index = jnp.stack([src, dst]).astype(jnp.int32)                  # [2, 2N]

    policy = PolicyPallas(node_state_dim=D, node_num=N, type_num=T,
                          condition_state_size=C, hidden_size=H)

    # f32 I/O path (tight check)
    value, hidden_actor = policy.base_forward(x, edge_index, condition_state,
                                              node_index, type_index)
    jax.block_until_ready((value, hidden_actor))

    v_ref, ha_ref = _reference_forward(policy, x, edge_index, condition_state,
                                       node_index, type_index)
    np.testing.assert_allclose(np.asarray(value), np.asarray(v_ref),
                               rtol=2e-4, atol=2e-5)
    np.testing.assert_allclose(np.asarray(hidden_actor), np.asarray(ha_ref),
                               rtol=2e-4, atol=2e-5)
    assert value.shape == (B, 1) and hidden_actor.shape == (B, N, H)

    # bf16 I/O path (HBM-bandwidth optimization; relaxed tolerance)
    value_bf, ha_bf = policy.base_forward(x, edge_index, condition_state,
                                          node_index, type_index,
                                          io_dtype=jnp.bfloat16)
    jax.block_until_ready((value_bf, ha_bf))
    np.testing.assert_allclose(np.asarray(value_bf), np.asarray(v_ref),
                               rtol=5e-2, atol=3e-2)
    np.testing.assert_allclose(np.asarray(ha_bf.astype(jnp.float32)),
                               np.asarray(ha_ref), rtol=5e-2, atol=3e-2)
    assert value_bf.shape == (B, 1) and ha_bf.shape == (B, N, H)

    print("KERNEL_OK")
</pallas_src>

<mosaic_0001>
module attributes {stable_mosaic.version = 11 : i64} {
  func.func @gnnbase_kernel(%arg0: i32, %arg1: memref<2x56xf32, #tpu.memory_space<vmem>>, %arg2: memref<2x16xf32, #tpu.memory_space<vmem>>, %arg3: memref<56x144xf32, #tpu.memory_space<vmem>>, %arg4: memref<1x128xf32, #tpu.memory_space<vmem>>, %arg5: memref<1x16xf32, #tpu.memory_space<vmem>>, %arg6: memref<1x16xf32, #tpu.memory_space<vmem>>, %arg7: memref<1x1xf32, #tpu.memory_space<smem>>, %arg8: memref<2x1xf32, #tpu.memory_space<vmem>>, %arg9: memref<2x128xf32, #tpu.memory_space<vmem>>) attributes {dimension_semantics = [#tpu.dimension_semantics<parallel>], iteration_bounds = array<i64: 1>, scalar_prefetch = 0 : i64, scratch_operands = 0 : i64, tpu.core_type = #tpu.core_type<tc>, window_params = [{transform_indices = @transform_0, window_bounds = array<i64: 2, 56>}, {transform_indices = @transform_1, window_bounds = array<i64: 2, 16>}, {pipeline_mode = #tpu.pipeline_mode<synchronous>, transform_indices = @transform_2, window_bounds = array<i64: 56, 144>}, {pipeline_mode = #tpu.pipeline_mode<synchronous>, transform_indices = @transform_3, window_bounds = array<i64: 1, 128>}, {pipeline_mode = #tpu.pipeline_mode<synchronous>, transform_indices = @transform_4, window_bounds = array<i64: 1, 16>}, {pipeline_mode = #tpu.pipeline_mode<synchronous>, transform_indices = @transform_5, window_bounds = array<i64: 1, 16>}, {transform_indices = @transform_6, window_bounds = array<i64: 1, 1>}, {transform_indices = @transform_7, window_bounds = array<i64: 2, 1>}, {transform_indices = @transform_8, window_bounds = array<i64: 2, 128>}]} {
    %c0 = arith.constant 0 : index
    %c0_0 = arith.constant 0 : index
    %0 = vector.load %arg1[%c0, %c0_0] : memref<2x56xf32, #tpu.memory_space<vmem>>, vector<2x56xf32>
    %c0_1 = arith.constant 0 : index
    %c0_2 = arith.constant 0 : index
    %1 = vector.load %arg3[%c0_1, %c0_2] : memref<56x144xf32, #tpu.memory_space<vmem>>, vector<56x144xf32>
    %cst = arith.constant dense<0.000000e+00> : vector<2x144xf32>
    %2 = tpu.matmul %0, %1, %cst {dimension_numbers = #tpu.dot_dimension_numbers<[1], [0], [0], [1], [0, 0, 1, 1], [], []>} : vector<2x56xf32>, vector<56x144xf32>, vector<2x144xf32> -> vector<2x144xf32>
    %3 = vector.extract_strided_slice %2 {offsets = [0, 0], sizes = [2, 128], strides = [1, 1]} : vector<2x144xf32> to vector<2x128xf32>
    %c0_3 = arith.constant 0 : index
    %c0_4 = arith.constant 0 : index
    %4 = vector.load %arg4[%c0_3, %c0_4] : memref<1x128xf32, #tpu.memory_space<vmem>>, vector<1x128xf32>
    %5 = vector.broadcast %4 : vector<1x128xf32> to vector<2x128xf32>
    %6 = arith.addf %3, %5 : vector<2x128xf32>
    %cst_5 = arith.constant 0.000000e+00 : f32
    %7 = vector.broadcast %cst_5 : f32 to vector<2x128xf32>
    %8 = arith.cmpf ogt, %6, %7 : vector<2x128xf32>
    %cst_6 = arith.constant 0.00999999977 : f32
    %9 = vector.broadcast %cst_6 : f32 to vector<2x128xf32>
    %10 = arith.mulf %9, %6 : vector<2x128xf32>
    %11 = arith.select %8, %6, %10 : vector<2x128xi1>, vector<2x128xf32>
    %c0_7 = arith.constant 0 : index
    %c0_8 = arith.constant 0 : index
    %12 = vector.load %arg9[%c0_7, %c0_8] : memref<2x128xf32, #tpu.memory_space<vmem>>, vector<2x128xf32>
    tpu.vector_store %arg9[%c0_7, %c0_8], %11 {strides = array<i32>} : memref<2x128xf32, #tpu.memory_space<vmem>>, vector<2x128xf32>,
    %13 = vector.extract_strided_slice %2 {offsets = [0, 128], sizes = [2, 16], strides = [1, 1]} : vector<2x144xf32> to vector<2x16xf32>
    %c0_9 = arith.constant 0 : index
    %c0_10 = arith.constant 0 : index
    %14 = vector.load %arg2[%c0_9, %c0_10] : memref<2x16xf32, #tpu.memory_space<vmem>>, vector<2x16xf32>
    %15 = arith.addf %13, %14 : vector<2x16xf32>
    %c0_11 = arith.constant 0 : index
    %c0_12 = arith.constant 0 : index
    %16 = vector.load %arg5[%c0_11, %c0_12] : memref<1x16xf32, #tpu.memory_space<vmem>>, vector<1x16xf32>
    %17 = vector.broadcast %16 : vector<1x16xf32> to vector<2x16xf32>
    %18 = arith.addf %15, %17 : vector<2x16xf32>
    %cst_13 = arith.constant 0.000000e+00 : f32
    %19 = vector.broadcast %cst_13 : f32 to vector<2x16xf32>
    %20 = arith.cmpf ogt, %18, %19 : vector<2x16xf32>
    %cst_14 = arith.constant 0.00999999977 : f32
    %21 = vector.broadcast %cst_14 : f32 to vector<2x16xf32>
    %22 = arith.mulf %21, %18 : vector<2x16xf32>
    %23 = arith.select %20, %18, %22 : vector<2x16xi1>, vector<2x16xf32>
    %c0_15 = arith.constant 0 : index
    %c0_16 = arith.constant 0 : index
    %24 = vector.load %arg6[%c0_15, %c0_16] : memref<1x16xf32, #tpu.memory_space<vmem>>, vector<1x16xf32>
    %25 = vector.broadcast %24 : vector<1x16xf32> to vector<2x16xf32>
    %26 = arith.mulf %23, %25 : vector<2x16xf32>
    %cst_17 = arith.constant dense<0.000000e+00> : vector<2xf32>
    %27 = vector.multi_reduction <add>, %26, %cst_17 [1] : vector<2x16xf32> to vector<2xf32>
    %28 = vector.shape_cast %27 : vector<2xf32> to vector<2x1xf32>
    %c0_18 = arith.constant 0 : index
    %c0_19 = arith.constant 0 : index
    %29 = memref.load %arg7[%c0_18, %c0_19] : memref<1x1xf32, #tpu.memory_space<smem>>
    %30 = vector.broadcast %29 : f32 to vector<2x1xf32>
    %31 = arith.addf %28, %30 : vector<2x1xf32>
    %c0_20 = arith.constant 0 : index
    %c0_21 = arith.constant 0 : index
    %32 = vector.load %arg8[%c0_20, %c0_21] : memref<2x1xf32, #tpu.memory_space<vmem>>, vector<2x1xf32>
    tpu.vector_store %arg8[%c0_20, %c0_21], %31 {strides = array<i32>} : memref<2x1xf32, #tpu.memory_space<vmem>>, vector<2x1xf32>,
    return
  }
  func.func @transform_0(%arg0: i32) -> (i32, i32) {
    %c0_i32 = arith.constant 0 : i32
    %c0_i32_0 = arith.constant 0 : i32
    return %arg0, %c0_i32 : i32, i32
  }
  func.func @transform_1(%arg0: i32) -> (i32, i32) {
    %c0_i32 = arith.constant 0 : i32
    %c0_i32_0 = arith.constant 0 : i32
    return %arg0, %c0_i32 : i32, i32
  }
  func.func @transform_2(%arg0: i32) -> (i32, i32) {
    %c0_i32 = arith.constant 0 : i32
    %c0_i32_0 = arith.constant 0 : i32
    %c0_i32_1 = arith.constant 0 : i32
    return %c0_i32, %c0_i32_0 : i32, i32
  }
  func.func @transform_3(%arg0: i32) -> (i32, i32) {
    %c0_i32 = arith.constant 0 : i32
    %c0_i32_0 = arith.constant 0 : i32
    %c0_i32_1 = arith.constant 0 : i32
    return %c0_i32, %c0_i32_0 : i32, i32
  }
  func.func @transform_4(%arg0: i32) -> (i32, i32) {
    %c0_i32 = arith.constant 0 : i32
    %c0_i32_0 = arith.constant 0 : i32
    %c0_i32_1 = arith.constant 0 : i32
    return %c0_i32, %c0_i32_0 : i32, i32
  }
  func.func @transform_5(%arg0: i32) -> (i32, i32) {
    %c0_i32 = arith.constant 0 : i32
    %c0_i32_0 = arith.constant 0 : i32
    %c0_i32_1 = arith.constant 0 : i32
    return %c0_i32, %c0_i32_0 : i32, i32
  }
  func.func @transform_6(%arg0: i32) -> (i32, i32) {
    %c0_i32 = arith.constant 0 : i32
    %c0_i32_0 = arith.constant 0 : i32
    %c0_i32_1 = arith.constant 0 : i32
    return %c0_i32, %c0_i32_0 : i32, i32
  }
  func.func @transform_7(%arg0: i32) -> (i32, i32) {
    %c0_i32 = arith.constant 0 : i32
    %c0_i32_0 = arith.constant 0 : i32
    return %arg0, %c0_i32 : i32, i32
  }
  func.func @transform_8(%arg0: i32) -> (i32, i32) {
    %c0_i32 = arith.constant 0 : i32
    %c0_i32_0 = arith.constant 0 : i32
    return %arg0, %c0_i32 : i32, i32
  }
}

</mosaic_0001>

<llo_original>
// kernel: tpu_custom_call.1
$region0: #{tpu_custom_call.1}
  #allocation0 [shape = 'u32[]', space=smem, size = 0x4, offset = 0x4, fixed_abs, tag = 'smem constant byte address 0x4 - core index']
  #allocation1 [shape = 'u32[72,128]{1,0:T(1,128)}', space=vmem, size = 0x9000, scoped, tag = 'internal scratch']
  #allocation2 [shape = 'f32[1,1]{1,0:T(1,128)S(6)}', space=smem, size = 0x200, scoped, tag = 'scoped memory for tpu_custom_call.1']
  %s0 = inlined_call_operand.vmem [shape: f32[2,56], index: 0, kind: input, shape index: {}]
  %s1 = inlined_call_operand.hbm [shape: f32[2,16], index: 1, kind: input, shape index: {}]
  %s2 = inlined_call_operand.hbm [shape: f32[56,144], index: 2, kind: input, shape index: {}]
  %s3 = inlined_call_operand.vmem [shape: f32[1,128], index: 3, kind: input, shape index: {}]
  %s4 = inlined_call_operand.vmem [shape: f32[1,16], index: 4, kind: input, shape index: {}]
  %s5 = inlined_call_operand.vmem [shape: f32[1,16], index: 5, kind: input, shape index: {}]
  %s6 = inlined_call_operand.<no memory space> [shape: f32[1,1], index: 6, kind: input, shape index: {}]
  %s7 = inlined_call_operand.vmem [shape: f32[2,1], index: 7, kind: output, shape index: {0}]
  %s8 = inlined_call_operand.hbm [shape: f32[2,128], index: 8, kind: output, shape index: {1}]
  %9 = xla_tuple %s7, %s8
  %s10 = sld [smem:[#allocation0]]
  $region54: #{tpu_custom_call.1} parent=0
    _
  %s12 = ssub.s32 1, %s10
  %s13 = scalar_select 0, %s12, %s10
  %14 = sst [smem:[#allocation2]] %s6
  $region1: #{tpu_custom_call.1} parent=0
    #allocation3 [shape = 'u8[1024]{0}', space=vmem, size = 0x400, scoped, tag = 'input window, operand 1, single buffered']
    #allocation4 [shape = 's32[1]{0}', space=sflag, size = 0x4, scoped, tag = 'scoped memory for tpu_custom_call.1']
    #allocation5 [shape = 's32[1]{0}', space=sflag, size = 0x4, scoped, tag = 'scoped memory for tpu_custom_call.1']
    #allocation6 [shape = 'u8[57344]{0}', space=vmem, size = 0xe000, scoped, tag = 'input window, operand 2, single buffered']
    #allocation7 [shape = 's32[1]{0}', space=sflag, size = 0x4, scoped, tag = 'scoped memory for tpu_custom_call.1']
    #allocation8 [shape = 'u8[1024]{0}', space=vmem, size = 0x400, scoped, tag = 'output window, operand 1, single buffered']
    %15 = vsyncpa [#allocation4], 0
    %16 = vsyncpa [#allocation7], 0
    %17 = vsyncpa [#allocation5], 0
    // Predicated region
    $region2: #{tpu_custom_call.1} parent=1 // pred_check
      _
    $region3: #{tpu_custom_call.1} parent=1 // pred_check_branch
      %19 = sbr.rel (0) target = $region5
    $region4: #{tpu_custom_call.1} parent=1 // pred_region
      _
    $region5: #{tpu_custom_call.1} parent=1 // pred_fallthru
      _
    // Predicated region
    $region6: #{tpu_custom_call.1} parent=1 // pred_check
      _
    $region7: #{tpu_custom_call.1} parent=1 // pred_check_branch
      %21 = sbr.rel (0) target = $region9
    $region8: #{tpu_custom_call.1} parent=1 // pred_region
      %23 = vsyncadd [#allocation4], 0
      %s25 = sshll.u32 %s1, 4
      %s26 = int_to_ptr.hbm [resolvable:$true] %s25
      %s27 = sshll.u32 [#allocation3], 4
      %s28 = int_to_ptr.vmem [resolvable:$true] %s27
      %30 = dma.hbm_to_vmem [thread:$0]  %s26, 32, %s28, [#allocation4]
    $region9: #{tpu_custom_call.1} parent=1 // pred_fallthru
      _
    // Predicated region
    $region10: #{tpu_custom_call.1} parent=1 // pred_check
      _
    $region11: #{tpu_custom_call.1} parent=1 // pred_check_branch
      %32 = sbr.rel (0) target = $region13
    $region12: #{tpu_custom_call.1} parent=1 // pred_region
      %34 = vsyncadd [#allocation7], 0
      %s35 = sshll.u32 %s2, 4
      %s36 = int_to_ptr.hbm [resolvable:$true] %s35
      %s37 = sshll.u32 [#allocation6], 4
      %s38 = int_to_ptr.vmem [resolvable:$true] %s37
      %43 = dma.hbm_to_vmem [thread:$0]  %s36, 1792, %s38, [#allocation7], 256, 256, 16
    $region13: #{tpu_custom_call.1} parent=1 // pred_fallthru
      _
    // Predicated region
    $region14: #{tpu_custom_call.1} parent=1 // pred_check
      _
    $region15: #{tpu_custom_call.1} parent=1 // pred_check_branch
      %45 = sbr.rel (0) target = $region17
    $region16: #{tpu_custom_call.1} parent=1 // pred_region
      _
    $region17: #{tpu_custom_call.1} parent=1 // pred_fallthru
      _
    // Predicated region
    $region18: #{tpu_custom_call.1} parent=1 // pred_check
      _
    $region19: #{tpu_custom_call.1} parent=1 // pred_check_branch
      %47 = sbr.rel (0) target = $region21
    $region20: #{tpu_custom_call.1} parent=1 // pred_region
      _
    $region21: #{tpu_custom_call.1} parent=1 // pred_fallthru
      _
    // Predicated region
    $region22: #{tpu_custom_call.1} parent=1 // pred_check
      _
    $region23: #{tpu_custom_call.1} parent=1 // pred_check_branch
      %49 = sbr.rel (0) target = $region25
    $region24: #{tpu_custom_call.1} parent=1 // pred_region
      _
    $region25: #{tpu_custom_call.1} parent=1 // pred_fallthru
      _
    // Predicated region
    $region26: #{tpu_custom_call.1} parent=1 // pred_check
      _
    $region27: #{tpu_custom_call.1} parent=1 // pred_check_branch
      %51 = sbr.rel (0) target = $region29
    $region28: #{tpu_custom_call.1} parent=1 // pred_region
      _
    $region29: #{tpu_custom_call.1} parent=1 // pred_fallthru
      _
    // Predicated region
    $region30: #{tpu_custom_call.1} parent=1 // pred_check
      _
    $region31: #{tpu_custom_call.1} parent=1 // pred_check_branch
      %53 = sbr.rel (0) target = $region33
    $region32: #{tpu_custom_call.1} parent=1 // pred_region
      %55 = dma.done [#allocation4], 32
    $region33: #{tpu_custom_call.1} parent=1 // pred_fallthru
      _
    // Predicated region
    $region34: #{tpu_custom_call.1} parent=1 // pred_check
      _
    $region35: #{tpu_custom_call.1} parent=1 // pred_check_branch
      %57 = sbr.rel (0) target = $region37
    $region36: #{tpu_custom_call.1} parent=1 // pred_region
      %59 = dma.done [#allocation7], 1792
    $region37: #{tpu_custom_call.1} parent=1 // pred_fallthru
      _
    %v60 = vld [vmem:[%s0] sm:$0x3]
    %v61 = vld [vmem:[#allocation6] sm:$0xff]
    %v62 = vld [vmem:[#allocation6 + $0x8] sm:$0xff]
    %v63 = vld [vmem:[#allocation6 + $0x10] sm:$0xff]
    %v64 = vld [vmem:[#allocation6 + $0x18] sm:$0xff]
    %v65 = vld [vmem:[#allocation6 + $0x20] sm:$0xff]
    %v66 = vld [vmem:[#allocation6 + $0x28] sm:$0xff]
    %v67 = vld [vmem:[#allocation6 + $0x30] sm:$0xff]
    %v68 = vld [vmem:[#allocation6 + $0x38] sm:$0xff]
    %v69 = vld [vmem:[#allocation6 + $0x40] sm:$0xff]
    %v70 = vld [vmem:[#allocation6 + $0x48] sm:$0xff]
    %v71 = vld [vmem:[#allocation6 + $0x50] sm:$0xff]
    %v72 = vld [vmem:[#allocation6 + $0x58] sm:$0xff]
    %v73 = vld [vmem:[#allocation6 + $0x60] sm:$0xff]
    %v74 = vld [vmem:[#allocation6 + $0x68] sm:$0xff]
    %vm75 = vcmask 457728
    %v77 = vsel %vm75, %v60, 0
    %79 = vmatpush.msra.mxu0 0.0
    %80 = vmatpush.msra.mxu0 0.0
    %81 = vmatpush.msra.mxu0 0.0
    %82 = vmatpush.msra.mxu0 0.0
    %83 = vmatpush.msra.mxu0 0.0
    %84 = vmatpush.msra.mxu0 0.0
    %85 = vmatpush.msra.mxu0 0.0
    %86 = vmatpush.msra.mxu0 0.0
    %87 = vmatpush.msra.mxu0 0.0
    %88 = vmatpush.msra.mxu0 %v73
    %89 = vmatpush.msra.mxu0 %v71
    %90 = vmatpush.msra.mxu0 %v69
    %91 = vmatpush.msra.mxu0 %v67
    %92 = vmatpush.msra.mxu0 %v65
    %93 = vmatpush.msra.mxu0 %v63
    %94 = vmatpush.msra.mxu0 %v61
    %95 = vmatmul.f32.gmra.mxu0 %v77
    %v96 = vpop.f32.mrf.mxu0
    %v97 = vadd.f32 0.0, %v96
    %98 = vdwg.mxu0
    %99 = vmatpush.msra.mxu0 0.0
    %100 = vmatpush.msra.mxu0 0.0
    %101 = vmatpush.msra.mxu0 0.0
    %102 = vmatpush.msra.mxu0 0.0
    %103 = vmatpush.msra.mxu0 0.0
    %104 = vmatpush.msra.mxu0 0.0
    %105 = vmatpush.msra.mxu0 0.0
    %106 = vmatpush.msra.mxu0 0.0
    %107 = vmatpush.msra.mxu0 0.0
    %108 = vmatpush.msra.mxu0 %v74
    %109 = vmatpush.msra.mxu0 %v72
    %110 = vmatpush.msra.mxu0 %v70
    %111 = vmatpush.msra.mxu0 %v68
    %112 = vmatpush.msra.mxu0 %v66
    %113 = vmatpush.msra.mxu0 %v64
    %114 = vmatpush.msra.mxu0 %v62
    %115 = vmatmul.f32.gmra.mxu0 %v77
    %v116 = vpop.f32.mrf.mxu0
    %v117 = vadd.f32 0.0, %v116
    %118 = vdwg.mxu0
    %v119 = vld [vmem:[%s3] sm:$0x1]
    %v121 = vperm.slane %v119, 0
    %v123 = vadd.f32 %v97, %v121
    %vm124 = vcmp.gt.f32.partialorder %v123, 0.0
    %v125 = vmul.f32 %v123, 0.01
    %v126 = vsel %vm124, %v123, %v125
    %127 = vst [vmem:[#allocation8] sm:$0x3] %v126
    %v128 = vld [vmem:[#allocation3] sm:$0x3]
    %v129 = vadd.f32 %v117, %v128
    %v130 = vld [vmem:[%s4] sm:$0x1]
    %v132 = vperm.slane %v130, 0
    %v134 = vadd.f32 %v129, %v132
    %vm135 = vcmp.gt.f32.partialorder %v134, 0.0
    %v136 = vmul.f32 %v134, 0.01
    %v137 = vsel %vm135, %v134, %v136
    %v138 = vld [vmem:[%s5] sm:$0x1]
    %v140 = vperm.slane %v138, 0
    %v142 = vmul.f32 %v137, %v140
    %vm143 = vcmask 123904
    %v144 = vsel %vm143, %v142, 0.0
    %145 = vadd.xlane.f32.xlu0 %v144
    %v146 = vpop.xlane.xlu0 %145
    %s147 = sld [smem:[#allocation2]]
    %v148 = vstv %s147
    %v149 = vadd.f32 %v146, %v148
    %vm150 = vcmask 1024
    %151 = vst.msk [vmem:[%s7] sm:$0x3] %vm150, %v149
    // Predicated region
    $region38: #{tpu_custom_call.1} parent=1 // pred_check
      _
    $region39: #{tpu_custom_call.1} parent=1 // pred_check_branch
      %153 = sbr.rel (0) target = $region41
    $region40: #{tpu_custom_call.1} parent=1 // pred_region
      _
    $region41: #{tpu_custom_call.1} parent=1 // pred_fallthru
      _
    // Predicated region
    $region42: #{tpu_custom_call.1} parent=1 // pred_check
      _
    $region43: #{tpu_custom_call.1} parent=1 // pred_check_branch
      %155 = sbr.rel (0) target = $region45
    $region44: #{tpu_custom_call.1} parent=1 // pred_region
      %157 = vsyncadd [#allocation5], 0
      %s159 = sshll.u32 [#allocation8], 4
      %s160 = int_to_ptr.vmem [resolvable:$true] %s159
      %s161 = sshll.u32 %s8, 4
      %s162 = int_to_ptr.hbm [resolvable:$true] %s161
      %164 = dma.vmem_to_hbm [thread:$0]  %s160, 32, %s162, [#allocation5]
    $region45: #{tpu_custom_call.1} parent=1 // pred_fallthru
      _
    // Predicated region
    $region46: #{tpu_custom_call.1} parent=1 // pred_check
      _
    $region47: #{tpu_custom_call.1} parent=1 // pred_check_branch
      %166 = sbr.rel (0) target = $region49
    $region48: #{tpu_custom_call.1} parent=1 // pred_region
      _
    $region49: #{tpu_custom_call.1} parent=1 // pred_fallthru
      _
    // Predicated region
    $region50: #{tpu_custom_call.1} parent=1 // pred_check
      _
    $region51: #{tpu_custom_call.1} parent=1 // pred_check_branch
      %168 = sbr.rel (0) target = $region53
    $region52: #{tpu_custom_call.1} parent=1 // pred_region
      %170 = dma.done [#allocation5], 32
    $region53: #{tpu_custom_call.1} parent=1 // pred_fallthru
      _
    %171 = vsyncpa [#allocation4], 1
    %172 = vsyncpa [#allocation7], 1
    %173 = vsyncpa [#allocation5], 1

</llo_original>
